<compile_context>
chip_gen: v5e
topology: v5e:2x2
jax: 0.10.0
libtpu: 0.0.40
codegen_flags: <defaults>
</compile_context>

<pallas_src>
import jax
import jax.numpy as jnp
from jax import lax
from jax.experimental import pallas as pl
from jax.experimental.pallas import tpu as pltpu


def _ssm_fused_matmul_kernel(x_ref, m_ref, o_ref):
    # x_ref: (bs, N)   flattened inputs (full, resident every grid step)
    # m_ref: (N, tn)   column block of the fused block-Toeplitz operator
    # o_ref: (bs, tn)  lane-dense output block (tn is 128 or full N)
    o_ref[...] = jnp.dot(x_ref[...], m_ref[...],
                         preferred_element_type=jnp.float32)


def ssm_fwd_pallas(x_set, B, Lambda):
    bs, seq, d = x_set.shape
    N = seq * d

    # --- weight-only precompute (host/XLA side) ------------------------------
    # K_j = Lambda^j @ B for j = 0..seq-1.  seq is tiny here, so a linear scan
    # is fine; use log-depth repeated squaring if seq grows large.
    def step(carry, _):
        return Lambda @ carry, carry

    _, Ks = lax.scan(step, B, None, length=seq)          # Ks[j] = Lambda^j @ B

    # Block-lower-triangular Toeplitz operator M (N, N), already transposed so
    # the kernel needs no XLU transpose:
    #   M[t*d + k, T*d + i] = K_{T-t}[i, k]   for T >= t, else 0.
    KsT = jnp.transpose(Ks, (0, 2, 1))                   # KsT[j] = K_j^T
    idx = jnp.arange(seq)
    diff = idx[None, :] - idx[:, None]                   # [t, T] -> T - t
    blocks = jnp.where((diff >= 0)[:, :, None, None],
                       KsT[jnp.clip(diff, 0, seq - 1)],
                       0.0)                              # (t, T, d, d)
    M = blocks.transpose(0, 2, 1, 3).reshape(N, N).astype(jnp.float32)

    x_flat = x_set.reshape(bs, N).astype(jnp.float32)

    # --- single fused matmul on the MXU --------------------------------------
    # Split the output columns into 128-wide lane-dense blocks; with N=256 that
    # gives a size-2 "parallel" grid axis (one block per TensorCore on v7x).
    tn = 128 if N % 128 == 0 else N
    n_blocks = N // tn

    out_flat = pl.pallas_call(
        _ssm_fused_matmul_kernel,
        out_shape=jax.ShapeDtypeStruct((bs, N), jnp.float32),
        grid_spec=pltpu.PrefetchScalarGridSpec(
            num_scalar_prefetch=0,
            grid=(n_blocks,),
            in_specs=[
                pl.BlockSpec((bs, N), lambda j: (0, 0)),    # x_flat: full
                pl.BlockSpec((N, tn), lambda j: (0, j)),    # M: column block
            ],
            out_specs=pl.BlockSpec((bs, tn), lambda j: (0, j)),
        ),
        compiler_params=pltpu.CompilerParams(
            dimension_semantics=("parallel",),
        ),
    )(x_flat, M)

    return out_flat.reshape(bs, seq, d)


def _orthogonal(key, n):
    # Deterministic orthogonal init (analogue of torch.nn.init.orthogonal_).
    a = jax.random.normal(key, (n, n), dtype=jnp.float32)
    q, r = jnp.linalg.qr(a)
    s = jnp.sign(jnp.diag(r))
    s = jnp.where(s == 0, 1.0, s)       # avoid zeroing a column if diag(r)==0
    return q * s[None, :]


def _ssm_fwd_ref(x_set, B, Lambda):
    # Pure-JAX reference (direct transcription of the PyTorch double loop).
    bs, seq, d = x_set.shape
    outs = []
    for T in range(seq):
        acc = jnp.zeros((bs, d), jnp.float32)
        Lj = jnp.eye(d, dtype=jnp.float32)
        for j in range(T + 1):
            acc = acc + jnp.einsum("ij,jk,bk->bi", Lj, B, x_set[:, T - j])
            Lj = Lj @ Lambda
        outs.append(acc)
    return jnp.stack(outs, axis=1)  # (bs, seq, d)


if __name__ == "__main__":
    x_dim = 32
    phi_dim = 32   # unused in forward, kept for parity with the module signature
    bs, seq = 2, 8

    key = jax.random.PRNGKey(0)
    k_a, k_b, k_l, k_x = jax.random.split(key, 4)

    # Parameters (A is defined in __init__ but unused by forward).
    A = _orthogonal(k_a, x_dim)        # noqa: F841  (unused, mirrors the module)
    B = _orthogonal(k_b, x_dim)
    Lambda = _orthogonal(k_l, x_dim)

    x_set = jax.random.normal(k_x, (bs, seq, x_dim), dtype=jnp.float32)

    fwd = jax.jit(ssm_fwd_pallas)
    out = jax.block_until_ready(fwd(x_set, B, Lambda))

    ref = _ssm_fwd_ref(x_set, B, Lambda)
    assert out.shape == (bs, seq, x_dim)
    assert jnp.allclose(out, ref, atol=1e-4, rtol=1e-4), "mismatch vs reference"

    print("KERNEL_OK")
</pallas_src>

<mosaic_0001>
module attributes {stable_mosaic.version = 11 : i64} {
  func.func @_ssm_fused_matmul_kernel(%arg0: i32, %arg1: memref<2x256xf32, #tpu.memory_space<vmem>>, %arg2: memref<256x128xf32, #tpu.memory_space<vmem>>, %arg3: memref<2x128xf32, #tpu.memory_space<vmem>>) attributes {dimension_semantics = [#tpu.dimension_semantics<parallel>], iteration_bounds = array<i64: 2>, scalar_prefetch = 0 : i64, scratch_operands = 0 : i64, tpu.core_type = #tpu.core_type<tc>, window_params = [{pipeline_mode = #tpu.pipeline_mode<synchronous>, transform_indices = @transform_0, window_bounds = array<i64: 2, 256>}, {transform_indices = @transform_1, window_bounds = array<i64: 256, 128>}, {transform_indices = @transform_2, window_bounds = array<i64: 2, 128>}]} {
    %c0 = arith.constant 0 : index
    %c0_0 = arith.constant 0 : index
    %0 = vector.load %arg1[%c0, %c0_0] : memref<2x256xf32, #tpu.memory_space<vmem>>, vector<2x256xf32>
    %c0_1 = arith.constant 0 : index
    %c0_2 = arith.constant 0 : index
    %1 = vector.load %arg2[%c0_1, %c0_2] : memref<256x128xf32, #tpu.memory_space<vmem>>, vector<256x128xf32>
    %cst = arith.constant dense<0.000000e+00> : vector<2x128xf32>
    %2 = tpu.matmul %0, %1, %cst {dimension_numbers = #tpu.dot_dimension_numbers<[1], [0], [0], [1], [0, 0, 1, 1], [], []>} : vector<2x256xf32>, vector<256x128xf32>, vector<2x128xf32> -> vector<2x128xf32>
    %c0_3 = arith.constant 0 : index
    %c0_4 = arith.constant 0 : index
    %3 = vector.load %arg3[%c0_3, %c0_4] : memref<2x128xf32, #tpu.memory_space<vmem>>, vector<2x128xf32>
    tpu.vector_store %arg3[%c0_3, %c0_4], %2 {strides = array<i32>} : memref<2x128xf32, #tpu.memory_space<vmem>>, vector<2x128xf32>,
    return
  }
  func.func @transform_0(%arg0: i32) -> (i32, i32) {
    %c0_i32 = arith.constant 0 : i32
    %c0_i32_0 = arith.constant 0 : i32
    %c0_i32_1 = arith.constant 0 : i32
    return %c0_i32, %c0_i32_0 : i32, i32
  }
  func.func @transform_1(%arg0: i32) -> (i32, i32) {
    %c0_i32 = arith.constant 0 : i32
    %c0_i32_0 = arith.constant 0 : i32
    return %c0_i32, %arg0 : i32, i32
  }
  func.func @transform_2(%arg0: i32) -> (i32, i32) {
    %c0_i32 = arith.constant 0 : i32
    %c0_i32_0 = arith.constant 0 : i32
    return %c0_i32, %arg0 : i32, i32
  }
}

</mosaic_0001>

<llo_original>
// kernel: custom-call.2
$region0: #{custom-call.2}
  %s0 = inlined_call_operand.vmem [shape: f32[8,32,32], index: 0, kind: output, shape index: {}]

// kernel: ssm_fwd_pallas.1
$region0: #{ssm_fwd_pallas.1}
  #allocation0 [shape = 'u32[]', space=smem, size = 0x4, offset = 0x4, fixed_abs, tag = 'smem constant byte address 0x4 - core index']
  #allocation1 [shape = 'u32[72,128]{1,0:T(1,128)}', space=vmem, size = 0x9000, scoped, tag = 'internal scratch']
  %s0 = inlined_call_operand.vmem [shape: f32[2,256], index: 0, kind: input, shape index: {}]
  %s1 = inlined_call_operand.vmem [shape: f32[256,256], index: 1, kind: input, shape index: {}]
  %s2 = inlined_call_operand.vmem [shape: f32[2,256], index: 2, kind: output, shape index: {}]
  %s3 = sld [smem:[#allocation0]]
  $region79: #{ssm_fwd_pallas.1} parent=0
    _
  %s5 = ssub.s32 1, %s3
  %s6 = scalar_select 0, %s5, %s3
  $region1: #{ssm_fwd_pallas.1} parent=0
    #allocation2 [shape = 'u8[262144]{0}', space=vmem, size = 0x40000, scoped, tag = 'input window, operand 1']
    loop: start=0, step=1, limit=4
    $region2: #{ssm_fwd_pallas.1} parent=1 // loop_pre_header
      _
    $region3: #{ssm_fwd_pallas.1} parent=1 // loop_header
      %s8 = sphi 0, %s12
      %p9 = scmp.ge.s32.totalorder %s8, 4
      %s16 = sphi 0, %s16
      %s18 = sphi 0, %s16
      %s19 = sphi 0, %s18
      %s33 = sphi 0, %s19
      %s39 = sphi 0, %s41
      %s42 = sphi 0, %s39
      %s43 = sphi 0, %s42
      %s59 = sphi 0, %s43
      %s65 = sphi 0, %s67
      %s68 = sphi 0, %s65
      %s69 = sphi 0, %s68
      %s85 = sphi 0, %s69
    $region4: #{ssm_fwd_pallas.1} parent=1 // loop_header_branch
      %11 = sbr.rel (%p9) target = $region8
    $region5: #{ssm_fwd_pallas.1} parent=1 // loop_body
      %s13 = ssub.s32 %s8, 1
      %s14 = ssub.s32 %s8, 2
      %s15 = sadd.s32 %s8, 1
      %s17 = sadd.s32 %s16, 1
      %p20 = scmp.eq.s32.totalorder %s8, 1
      %p21 = scmp.ne.s32.totalorder %s16, %s18
      %p22 = scmp.eq.s32.totalorder %s8, 0
      %p23 = por %p21, %p22
      %p24 = scmp.ne.s32.totalorder %s16, %s18
      %p25 = scmp.eq.s32.totalorder %s13, 1
      %p26 = por %p24, %p25
      %p27 = scmp.ne.s32.totalorder %s18, %s19
      %p28 = scmp.eq.s32.totalorder %s13, 0
      %p29 = por %p27, %p28
      %p30 = scmp.ne.s32.totalorder %s18, %s19
      %p31 = scmp.eq.s32.totalorder %s14, 1
      %p32 = por %p30, %p31
      %p34 = scmp.ne.s32.totalorder %s19, %s33
      %p35 = scmp.eq.s32.totalorder %s14, 0
      %p36 = por %p34, %p35
      %s37 = ssub.s32 %s8, %s15
      %p38 = scmp.eq.s32.totalorder %s37, 0
      %s40 = sadd.s32 %s39, 1
      %s41 = scalar_select %p38, %s39, %s40
      %p44 = pneg %p38
      %p45 = scmp.eq.s32.totalorder %s8, 1
      %p46 = por %p44, %p45
      %p47 = scmp.ne.s32.totalorder %s39, %s42
      %p48 = scmp.eq.s32.totalorder %s8, 0
      %p49 = por %p47, %p48
      %p50 = scmp.ne.s32.totalorder %s39, %s42
      %p51 = scmp.eq.s32.totalorder %s13, 1
      %p52 = por %p50, %p51
      %p53 = scmp.ne.s32.totalorder %s42, %s43
      %p54 = scmp.eq.s32.totalorder %s13, 0
      %p55 = por %p53, %p54
      %p56 = scmp.ne.s32.totalorder %s42, %s43
      %p57 = scmp.eq.s32.totalorder %s14, 1
      %p58 = por %p56, %p57
      %p60 = scmp.ne.s32.totalorder %s43, %s59
      %p61 = scmp.eq.s32.totalorder %s14, 0
      %p62 = por %p60, %p61
      %s63 = ssub.s32 %s8, %s15
      %p64 = scmp.eq.s32.totalorder %s63, 0
      %s66 = sadd.s32 %s65, 1
      %s67 = scalar_select %p64, %s65, %s66
      %p70 = pneg %p64
      %p71 = scmp.eq.s32.totalorder %s8, 1
      %p72 = por %p70, %p71
      %p73 = scmp.ne.s32.totalorder %s65, %s68
      %p74 = scmp.eq.s32.totalorder %s8, 0
      %p75 = por %p73, %p74
      %p76 = scmp.ne.s32.totalorder %s65, %s68
      %p77 = scmp.eq.s32.totalorder %s13, 1
      %p78 = por %p76, %p77
      %p79 = scmp.ne.s32.totalorder %s68, %s69
      %p80 = scmp.eq.s32.totalorder %s13, 0
      %p81 = por %p79, %p80
      %p82 = scmp.ne.s32.totalorder %s68, %s69
      %p83 = scmp.eq.s32.totalorder %s14, 1
      %p84 = por %p82, %p83
      %p86 = scmp.ne.s32.totalorder %s69, %s85
      %p87 = scmp.eq.s32.totalorder %s14, 0
      %p88 = por %p86, %p87
      %p89 = scmp.le.s32.totalorder 1, %s8
      %p90 = scmp.lt.s32.totalorder %s8, 3
      %p91 = pnand %p89, %p90
      %p92 = pneg %p91
      // Predicated region
      $region9: #{ssm_fwd_pallas.1} parent=5 // pred_check
        _
      $region10: #{ssm_fwd_pallas.1} parent=5 // pred_check_branch
        %94 = sbr.rel (%p91) target = $region12
      $region11: #{ssm_fwd_pallas.1} parent=5 // pred_region
        %s95 = ssub.s32 %s8, 1
        // Predicated region
        $region13: #{ssm_fwd_pallas.1} parent=11 // pred_check
          %p96 = pneg %p29
        $region14: #{ssm_fwd_pallas.1} parent=11 // pred_check_branch
          %98 = sbr.rel (%p96) target = $region16
        $region15: #{ssm_fwd_pallas.1} parent=11 // pred_region
          _
        $region16: #{ssm_fwd_pallas.1} parent=11 // pred_fallthru
          _
      $region12: #{ssm_fwd_pallas.1} parent=5 // pred_fallthru
        _
      %p99 = scmp.lt.s32.totalorder %s8, 2
      // Predicated region
      $region17: #{ssm_fwd_pallas.1} parent=5 // pred_check
        %p100 = pneg %p99
      $region18: #{ssm_fwd_pallas.1} parent=5 // pred_check_branch
        %102 = sbr.rel (%p100) target = $region20
      $region19: #{ssm_fwd_pallas.1} parent=5 // pred_region
        // Predicated region
        $region21: #{ssm_fwd_pallas.1} parent=19 // pred_check
          %p103 = pneg %p49
        $region22: #{ssm_fwd_pallas.1} parent=19 // pred_check_branch
          %105 = sbr.rel (%p103) target = $region24
        $region23: #{ssm_fwd_pallas.1} parent=19 // pred_region
          %s106 = sand.u32 %s39, 1
          %s107 = sand.u32 %s39, 1
          %s108 = smul.addr %s107, 256
          %s109 = scalar_lea.vmem [#allocation2], %s108
          %s110 = smul.addr %s8, 8
          %s111 = scalar_lea.vmem %s1, %s110
          // Predicated region
          $region25: #{ssm_fwd_pallas.1} parent=23 // pred_check
            _
          $region26: #{ssm_fwd_pallas.1} parent=23 // pred_check_branch
            %113 = sbr.rel (0) target = $region28
          $region27: #{ssm_fwd_pallas.1} parent=23 // pred_region
            // Predicated region
            $region29: #{ssm_fwd_pallas.1} parent=27 // pred_check
              _
            $region30: #{ssm_fwd_pallas.1} parent=27 // pred_check_branch
              %115 = sbr.rel (0) target = $region32
            $region31: #{ssm_fwd_pallas.1} parent=27 // pred_region
              // Predicated region
              $region44: #{ssm_fwd_pallas.1} parent=31 // pred_check
                _
              $region45: #{ssm_fwd_pallas.1} parent=31 // pred_check_branch
                %193 = sbr.rel (0) target = $region47
              $region46: #{ssm_fwd_pallas.1} parent=31 // pred_region
                loop: start=0, step=1, limit=1
                $region48: #{ssm_fwd_pallas.1} parent=46 // loop_pre_header
                  _
                $region49: #{ssm_fwd_pallas.1} parent=46 // loop_header
                  %s195 = sphi 0, %s199
                  %p196 = scmp.ge.s32.totalorder %s195, 1
                  %s200 = sphi %s111, %s111
                  %s201 = sphi %s109, %s109
                $region50: #{ssm_fwd_pallas.1} parent=46 // loop_header_branch
                  %198 = sbr.rel (%p196) target = $region54
                $region51: #{ssm_fwd_pallas.1} parent=46 // loop_body
                  %v202 = vld [vmem:[%s200] sm:$0xff]
                  %203 = vst [vmem:[%s201] sm:$0xff] %v202
                  %v204 = vld [vmem:[%s200 + $0x10] sm:$0xff]
                  %205 = vst [vmem:[%s201 + $0x8] sm:$0xff] %v204
                  %v206 = vld [vmem:[%s200 + $0x20] sm:$0xff]
                  %207 = vst [vmem:[%s201 + $0x10] sm:$0xff] %v206
                  %v208 = vld [vmem:[%s200 + $0x30] sm:$0xff]
                  %209 = vst [vmem:[%s201 + $0x18] sm:$0xff] %v208
                  %v210 = vld [vmem:[%s200 + $0x40] sm:$0xff]
                  %211 = vst [vmem:[%s201 + $0x20] sm:$0xff] %v210
                  %v212 = vld [vmem:[%s200 + $0x50] sm:$0xff]
                  %213 = vst [vmem:[%s201 + $0x28] sm:$0xff] %v212
                  %v214 = vld [vmem:[%s200 + $0x60] sm:$0xff]
                  %215 = vst [vmem:[%s201 + $0x30] sm:$0xff] %v214
                  %v216 = vld [vmem:[%s200 + $0x70] sm:$0xff]
                  %217 = vst [vmem:[%s201 + $0x38] sm:$0xff] %v216
                  %v218 = vld [vmem:[%s200 + $0x80] sm:$0xff]
                  %219 = vst [vmem:[%s201 + $0x40] sm:$0xff] %v218
                  %v220 = vld [vmem:[%s200 + $0x90] sm:$0xff]
                  %221 = vst [vmem:[%s201 + $0x48] sm:$0xff] %v220
                  %v222 = vld [vmem:[%s200 + $0xa0] sm:$0xff]
                  %223 = vst [vmem:[%s201 + $0x50] sm:$0xff] %v222
                  %v224 = vld [vmem:[%s200 + $0xb0] sm:$0xff]
                  %225 = vst [vmem:[%s201 + $0x58] sm:$0xff] %v224
                  %v226 = vld [vmem:[%s200 + $0xc0] sm:$0xff]
                  %227 = vst [vmem:[%s201 + $0x60] sm:$0xff] %v226
                  %v228 = vld [vmem:[%s200 + $0xd0] sm:$0xff]
                  %229 = vst [vmem:[%s201 + $0x68] sm:$0xff] %v228
                  %v230 = vld [vmem:[%s200 + $0xe0] sm:$0xff]
                  %231 = vst [vmem:[%s201 + $0x70] sm:$0xff] %v230
                  %v232 = vld [vmem:[%s200 + $0xf0] sm:$0xff]
                  %233 = vst [vmem:[%s201 + $0x78] sm:$0xff] %v232
                  %v234 = vld [vmem:[%s200 + $0x100] sm:$0xff]
                  %235 = vst [vmem:[%s201 + $0x80] sm:$0xff] %v234
                  %v236 = vld [vmem:[%s200 + $0x110] sm:$0xff]
                  %237 = vst [vmem:[%s201 + $0x88] sm:$0xff] %v236
                  %v238 = vld [vmem:[%s200 + $0x120] sm:$0xff]
                  %239 = vst [vmem:[%s201 + $0x90] sm:$0xff] %v238
                  %v240 = vld [vmem:[%s200 + $0x130] sm:$0xff]
                  %241 = vst [vmem:[%s201 + $0x98] sm:$0xff] %v240
                  %v242 = vld [vmem:[%s200 + $0x140] sm:$0xff]
                  %243 = vst [vmem:[%s201 + $0xa0] sm:$0xff] %v242
                  %v244 = vld [vmem:[%s200 + $0x150] sm:$0xff]
                  %245 = vst [vmem:[%s201 + $0xa8] sm:$0xff] %v244
                  %v246 = vld [vmem:[%s200 + $0x160] sm:$0xff]
                  %247 = vst [vmem:[%s201 + $0xb0] sm:$0xff] %v246
                  %v248 = vld [vmem:[%s200 + $0x170] sm:$0xff]
                  %249 = vst [vmem:[%s201 + $0xb8] sm:$0xff] %v248
                  %v250 = vld [vmem:[%s200 + $0x180] sm:$0xff]
                  %251 = vst [vmem:[%s201 + $0xc0] sm:$0xff] %v250
                  %v252 = vld [vmem:[%s200 + $0x190] sm:$0xff]
                  %253 = vst [vmem:[%s201 + $0xc8] sm:$0xff] %v252
                  %v254 = vld [vmem:[%s200 + $0x1a0] sm:$0xff]
                  %255 = vst [vmem:[%s201 + $0xd0] sm:$0xff] %v254
                  %v256 = vld [vmem:[%s200 + $0x1b0] sm:$0xff]
                  %257 = vst [vmem:[%s201 + $0xd8] sm:$0xff] %v256
                  %v258 = vld [vmem:[%s200 + $0x1c0] sm:$0xff]
                  %259 = vst [vmem:[%s201 + $0xe0] sm:$0xff] %v258
                  %v260 = vld [vmem:[%s200 + $0x1d0] sm:$0xff]
                  %261 = vst [vmem:[%s201 + $0xe8] sm:$0xff] %v260
                  %v262 = vld [vmem:[%s200 + $0x1e0] sm:$0xff]
                  %263 = vst [vmem:[%s201 + $0xf0] sm:$0xff] %v262
                  %v264 = vld [vmem:[%s200 + $0x1f0] sm:$0xff]
                  %265 = vst [vmem:[%s201 + $0xf8] sm:$0xff] %v264
                $region52: #{ssm_fwd_pallas.1} parent=46 // loop_footer
                  %s199 = sadd.s32 1, %s195
                $region53: #{ssm_fwd_pallas.1} parent=46 // loop_footer_branch
                  %194 = sbr.rel target = $region49
                $region54: #{ssm_fwd_pallas.1} parent=46 // loop_exit
                  _
              $region47: #{ssm_fwd_pallas.1} parent=31 // pred_fallthru
                _
              // Predicated region
              $region55: #{ssm_fwd_pallas.1} parent=31 // pred_check
                _
              $region56: #{ssm_fwd_pallas.1} parent=31 // pred_check_branch
                %267 = sbr.rel target = $region58
              $region57: #{ssm_fwd_pallas.1} parent=31 // pred_region
                _
              $region58: #{ssm_fwd_pallas.1} parent=31 // pred_fallthru
                _
            $region32: #{ssm_fwd_pallas.1} parent=27 // pred_fallthru
              _
            // Predicated region
            $region33: #{ssm_fwd_pallas.1} parent=27 // pred_check
              _
            $region34: #{ssm_fwd_pallas.1} parent=27 // pred_check_branch
              %117 = sbr.rel target = $region36
            $region35: #{ssm_fwd_pallas.1} parent=27 // pred_region
              %s119 = ssub.s32 256, 1
              loop: start=0, step=1, limit=1
              $region37: #{ssm_fwd_pallas.1} parent=35 // loop_pre_header
                _
              $region38: #{ssm_fwd_pallas.1} parent=35 // loop_header
                %s121 = sphi 0, %s125
                %p122 = scmp.ge.s32.totalorder %s121, 1
                %s126 = sphi %s111, %s111
                %s127 = sphi %s109, %s109
              $region39: #{ssm_fwd_pallas.1} parent=35 // loop_header_branch
                %124 = sbr.rel (%p122) target = $region43
              $region40: #{ssm_fwd_pallas.1} parent=35 // loop_body
                %v128 = vld [vmem:[%s126] sm:%s119]
                %129 = vst [vmem:[%s127] sm:%s119] %v128
                %v130 = vld [vmem:[%s126 + $0x10] sm:%s119]
                %131 = vst [vmem:[%s127 + $0x8] sm:%s119] %v130
                %v132 = vld [vmem:[%s126 + $0x20] sm:%s119]
                %133 = vst [vmem:[%s127 + $0x10] sm:%s119] %v132
                %v134 = vld [vmem:[%s126 + $0x30] sm:%s119]
                %135 = vst [vmem:[%s127 + $0x18] sm:%s119] %v134
                %v136 = vld [vmem:[%s126 + $0x40] sm:%s119]
                %137 = vst [vmem:[%s127 + $0x20] sm:%s119] %v136
                %v138 = vld [vmem:[%s126 + $0x50] sm:%s119]
                %139 = vst [vmem:[%s127 + $0x28] sm:%s119] %v138
                %v140 = vld [vmem:[%s126 + $0x60] sm:%s119]
                %141 = vst [vmem:[%s127 + $0x30] sm:%s119] %v140
                %v142 = vld [vmem:[%s126 + $0x70] sm:%s119]
                %143 = vst [vmem:[%s127 + $0x38] sm:%s119] %v142
                %v144 = vld [vmem:[%s126 + $0x80] sm:%s119]
                %145 = vst [vmem:[%s127 + $0x40] sm:%s119] %v144
                %v146 = vld [vmem:[%s126 + $0x90] sm:%s119]
                %147 = vst [vmem:[%s127 + $0x48] sm:%s119] %v146
                %v148 = vld [vmem:[%s126 + $0xa0] sm:%s119]
                %149 = vst [vmem:[%s127 + $0x50] sm:%s119] %v148
                %v150 = vld [vmem:[%s126 + $0xb0] sm:%s119]
                %151 = vst [vmem:[%s127 + $0x58] sm:%s119] %v150
                %v152 = vld [vmem:[%s126 + $0xc0] sm:%s119]
                %153 = vst [vmem:[%s127 + $0x60] sm:%s119] %v152
                %v154 = vld [vmem:[%s126 + $0xd0] sm:%s119]
                %155 = vst [vmem:[%s127 + $0x68] sm:%s119] %v154
                %v156 = vld [vmem:[%s126 + $0xe0] sm:%s119]
                %157 = vst [vmem:[%s127 + $0x70] sm:%s119] %v156
                %v158 = vld [vmem:[%s126 + $0xf0] sm:%s119]
                %159 = vst [vmem:[%s127 + $0x78] sm:%s119] %v158
                %v160 = vld [vmem:[%s126 + $0x100] sm:%s119]
                %161 = vst [vmem:[%s127 + $0x80] sm:%s119] %v160
                %v162 = vld [vmem:[%s126 + $0x110] sm:%s119]
                %163 = vst [vmem:[%s127 + $0x88] sm:%s119] %v162
                %v164 = vld [vmem:[%s126 + $0x120] sm:%s119]
                %165 = vst [vmem:[%s127 + $0x90] sm:%s119] %v164
                %v166 = vld [vmem:[%s126 + $0x130] sm:%s119]
                %167 = vst [vmem:[%s127 + $0x98] sm:%s119] %v166
                %v168 = vld [vmem:[%s126 + $0x140] sm:%s119]
                %169 = vst [vmem:[%s127 + $0xa0] sm:%s119] %v168
                %v170 = vld [vmem:[%s126 + $0x150] sm:%s119]
                %171 = vst [vmem:[%s127 + $0xa8] sm:%s119] %v170
                %v172 = vld [vmem:[%s126 + $0x160] sm:%s119]
                %173 = vst [vmem:[%s127 + $0xb0] sm:%s119] %v172
                %v174 = vld [vmem:[%s126 + $0x170] sm:%s119]
                %175 = vst [vmem:[%s127 + $0xb8] sm:%s119] %v174
                %v176 = vld [vmem:[%s126 + $0x180] sm:%s119]
                %177 = vst [vmem:[%s127 + $0xc0] sm:%s119] %v176
                %v178 = vld [vmem:[%s126 + $0x190] sm:%s119]
                %179 = vst [vmem:[%s127 + $0xc8] sm:%s119] %v178
                %v180 = vld [vmem:[%s126 + $0x1a0] sm:%s119]
                %181 = vst [vmem:[%s127 + $0xd0] sm:%s119] %v180
                %v182 = vld [vmem:[%s126 + $0x1b0] sm:%s119]
                %183 = vst [vmem:[%s127 + $0xd8] sm:%s119] %v182
                %v184 = vld [vmem:[%s126 + $0x1c0] sm:%s119]
                %185 = vst [vmem:[%s127 + $0xe0] sm:%s119] %v184
                %v186 = vld [vmem:[%s126 + $0x1d0] sm:%s119]
                %187 = vst [vmem:[%s127 + $0xe8] sm:%s119] %v186
                %v188 = vld [vmem:[%s126 + $0x1e0] sm:%s119]
                %189 = vst [vmem:[%s127 + $0xf0] sm:%s119] %v188
                %v190 = vld [vmem:[%s126 + $0x1f0] sm:%s119]
                %191 = vst [vmem:[%s127 + $0xf8] sm:%s119] %v190
              $region41: #{ssm_fwd_pallas.1} parent=35 // loop_footer
                %s125 = sadd.s32 1, %s121
              $region42: #{ssm_fwd_pallas.1} parent=35 // loop_footer_branch
                %120 = sbr.rel target = $region38
              $region43: #{ssm_fwd_pallas.1} parent=35 // loop_exit
                _
            $region36: #{ssm_fwd_pallas.1} parent=27 // pred_fallthru
              _
          $region28: #{ssm_fwd_pallas.1} parent=23 // pred_fallthru
            _
          %268 = vnop
        $region24: #{ssm_fwd_pallas.1} parent=19 // pred_fallthru
          _
      $region20: #{ssm_fwd_pallas.1} parent=5 // pred_fallthru
        _
      %p269 = scmp.le.s32.totalorder 1, %s8
      %p270 = scmp.lt.s32.totalorder %s8, 3
      %p271 = pnand %p269, %p270
      %p272 = pneg %p271
      // Predicated region
      $region59: #{ssm_fwd_pallas.1} parent=5 // pred_check
        _
      $region60: #{ssm_fwd_pallas.1} parent=5 // pred_check_branch
        %274 = sbr.rel (%p271) target = $region62
      $region61: #{ssm_fwd_pallas.1} parent=5 // pred_region
        %s275 = ssub.s32 %s8, 1
        %s276 = sand.u32 %s42, 1
        %s277 = sand.u32 %s42, 1
        %s278 = smul.addr %s277, 256
        %s279 = scalar_lea.vmem [#allocation2], %s278
        // Predicated region
        $region63: #{ssm_fwd_pallas.1} parent=61 // pred_check
          %p280 = pneg %p55
        $region64: #{ssm_fwd_pallas.1} parent=61 // pred_check_branch
          %282 = sbr.rel (%p280) target = $region66
        $region65: #{ssm_fwd_pallas.1} parent=61 // pred_region
          _
        $region66: #{ssm_fwd_pallas.1} parent=61 // pred_fallthru
          _
        %p283 = pneg %p29
        %p284 = pneg %p26
        %s285 = sand.u32 %s42, 1
        %s286 = sand.u32 %s42, 1
        %s287 = smul.addr %s286, 256
        %s288 = scalar_lea.vmem [#allocation2], %s287
        %p289 = pneg %p55
        %p290 = pneg %p52
        %p291 = pneg %p81
        %p292 = pneg %p78
        %p293 = scmp.lt.s32.totalorder %s13, 1
        %s294 = scalar_select %p293, %s13, 1
        %s295 = smul.addr %s294, 2
        %s296 = scalar_lea.vmem %s2, %s295
        %p297 = scmp.lt.s32.totalorder %s13, 1
        %s298 = scalar_select %p297, %s13, 1
        %s299 = smul.addr %s298, 2
        %s300 = scalar_lea.vmem %s2, %s299
        %v301 = vld [vmem:[%s0] sm:$0xf]
        %v302 = vld [vmem:[%s279] sm:$0xff]
        %v303 = vld [vmem:[%s279 + $0x8] sm:$0xff]
        %v304 = vld [vmem:[%s279 + $0x10] sm:$0xff]
        %v305 = vld [vmem:[%s279 + $0x18] sm:$0xff]
        %v306 = vld [vmem:[%s279 + $0x20] sm:$0xff]
        %v307 = vld [vmem:[%s279 + $0x28] sm:$0xff]
        %v308 = vld [vmem:[%s279 + $0x30] sm:$0xff]
        %v309 = vld [vmem:[%s279 + $0x38] sm:$0xff]
        %v310 = vld [vmem:[%s279 + $0x40] sm:$0xff]
        %v311 = vld [vmem:[%s279 + $0x48] sm:$0xff]
        %v312 = vld [vmem:[%s279 + $0x50] sm:$0xff]
        %v313 = vld [vmem:[%s279 + $0x58] sm:$0xff]
        %v314 = vld [vmem:[%s279 + $0x60] sm:$0xff]
        %v315 = vld [vmem:[%s279 + $0x68] sm:$0xff]
        %v316 = vld [vmem:[%s279 + $0x70] sm:$0xff]
        %v317 = vld [vmem:[%s279 + $0x78] sm:$0xff]
        %v318 = vld [vmem:[%s279 + $0x80] sm:$0xff]
        %v319 = vld [vmem:[%s279 + $0x88] sm:$0xff]
        %v320 = vld [vmem:[%s279 + $0x90] sm:$0xff]
        %v321 = vld [vmem:[%s279 + $0x98] sm:$0xff]
        %v322 = vld [vmem:[%s279 + $0xa0] sm:$0xff]
        %v323 = vld [vmem:[%s279 + $0xa8] sm:$0xff]
        %v324 = vld [vmem:[%s279 + $0xb0] sm:$0xff]
        %v325 = vld [vmem:[%s279 + $0xb8] sm:$0xff]
        %v326 = vld [vmem:[%s279 + $0xc0] sm:$0xff]
        %v327 = vld [vmem:[%s279 + $0xc8] sm:$0xff]
        %v328 = vld [vmem:[%s279 + $0xd0] sm:$0xff]
        %v329 = vld [vmem:[%s279 + $0xd8] sm:$0xff]
        %v330 = vld [vmem:[%s279 + $0xe0] sm:$0xff]
        %v331 = vld [vmem:[%s279 + $0xe8] sm:$0xff]
        %v332 = vld [vmem:[%s279 + $0xf0] sm:$0xff]
        %v333 = vld [vmem:[%s279 + $0xf8] sm:$0xff]
        %335 = vst [vmem:[#allocation1] ss:$4 sm:$0xff] %v301
        %v336 = vld.sshfl [vmem:[#allocation1] sm:$0xff pattern:$0x73625140]
        %v337 = vld.sshfl [vmem:[#allocation1 + $0x8] sm:$0xff pattern:$0x73625140]
        %340 = vmatpush.msra.mxu0 %v317
        %341 = vmatpush.msra.mxu0 %v316
        %342 = vmatpush.msra.mxu0 %v315
        %343 = vmatpush.msra.mxu0 %v314
        %344 = vmatpush.msra.mxu0 %v313
        %345 = vmatpush.msra.mxu0 %v312
        %346 = vmatpush.msra.mxu0 %v311
        %347 = vmatpush.msra.mxu0 %v310
        %348 = vmatpush.msra.mxu0 %v309
        %349 = vmatpush.msra.mxu0 %v308
        %350 = vmatpush.msra.mxu0 %v307
        %351 = vmatpush.msra.mxu0 %v306
        %352 = vmatpush.msra.mxu0 %v305
        %353 = vmatpush.msra.mxu0 %v304
        %354 = vmatpush.msra.mxu0 %v303
        %355 = vmatpush.msra.mxu0 %v302
        %356 = vmatmul.f32.gmra.mxu0 %v336
        %v357 = vpop.f32.mrf.mxu0
        %v358 = vadd.f32 0.0, %v357
        %359 = vdwg.mxu0
        %360 = vmatpush.msra.mxu0 %v333
        %361 = vmatpush.msra.mxu0 %v332
        %362 = vmatpush.msra.mxu0 %v331
        %363 = vmatpush.msra.mxu0 %v330
        %364 = vmatpush.msra.mxu0 %v329
        %365 = vmatpush.msra.mxu0 %v328
        %366 = vmatpush.msra.mxu0 %v327
        %367 = vmatpush.msra.mxu0 %v326
        %368 = vmatpush.msra.mxu0 %v325
        %369 = vmatpush.msra.mxu0 %v324
        %370 = vmatpush.msra.mxu0 %v323
        %371 = vmatpush.msra.mxu0 %v322
        %372 = vmatpush.msra.mxu0 %v321
        %373 = vmatpush.msra.mxu0 %v320
        %374 = vmatpush.msra.mxu0 %v319
        %375 = vmatpush.msra.mxu0 %v318
        %376 = vmatmul.f32.gmra.mxu0 %v337
        %v377 = vpop.f32.mrf.mxu0
        %v378 = vadd.f32 %v358, %v377
        %379 = vdwg.mxu0
        %380 = vst [vmem:[%s300] sm:$0x3] %v378
        %p381 = scmp.lt.s32.totalorder %s13, 1
        %s382 = scalar_select %p381, %s13, 1
        %s383 = smul.addr %s382, 2
        %s384 = scalar_lea.vmem %s2, %s383
        // Predicated region
        $region67: #{ssm_fwd_pallas.1} parent=61 // pred_check
          %p385 = pneg %p78
        $region68: #{ssm_fwd_pallas.1} parent=61 // pred_check_branch
          %387 = sbr.rel (%p385) target = $region70
        $region69: #{ssm_fwd_pallas.1} parent=61 // pred_region
          _
        $region70: #{ssm_fwd_pallas.1} parent=61 // pred_fallthru
          _
      $region62: #{ssm_fwd_pallas.1} parent=5 // pred_fallthru
        _
      %p388 = scmp.le.s32.totalorder 2, %s8
      // Predicated region
      $region71: #{ssm_fwd_pallas.1} parent=5 // pred_check
        %p389 = pneg %p388
      $region72: #{ssm_fwd_pallas.1} parent=5 // pred_check_branch
        %391 = sbr.rel (%p389) target = $region74
      $region73: #{ssm_fwd_pallas.1} parent=5 // pred_region
        %s392 = ssub.s32 %s8, 2
        // Predicated region
        $region75: #{ssm_fwd_pallas.1} parent=73 // pred_check
          %p393 = pneg %p84
        $region76: #{ssm_fwd_pallas.1} parent=73 // pred_check_branch
          %395 = sbr.rel (%p393) target = $region78
        $region77: #{ssm_fwd_pallas.1} parent=73 // pred_region
          %p396 = scmp.lt.s32.totalorder %s14, 1
          %s397 = scalar_select %p396, %s14, 1
          %s398 = smul.addr %s397, 2
          %s399 = scalar_lea.vmem %s2, %s398
        $region78: #{ssm_fwd_pallas.1} parent=73 // pred_fallthru
          _
      $region74: #{ssm_fwd_pallas.1} parent=5 // pred_fallthru
        _
    $region6: #{ssm_fwd_pallas.1} parent=1 // loop_footer
      %s12 = sadd.s32 1, %s8
    $region7: #{ssm_fwd_pallas.1} parent=1 // loop_footer_branch
      %7 = sbr.rel target = $region3
    $region8: #{ssm_fwd_pallas.1} parent=1 // loop_exit
      _

</llo_original>
